<compile_context>
chip_gen: v5e
topology: v5e:2x2
jax: 0.10.0
libtpu: 0.0.40
codegen_flags: <defaults>
</compile_context>

<pallas_src>
import jax
import jax.numpy as jnp
from jax.experimental import pallas as pl
from jax.experimental.pallas import tpu as pltpu


LANES = 512            # lane-dense last dim (large multiple of 128 -> unmasked vst)
TILE_ROWS = 1024       # 1024 x 512 x 4 B = 2 MiB per buffer
SMALL_N_ELEMS = 1 << 18  # ~1 MiB of f32: below this a fused jnp add beats a kernel


def _round_up(x: int, m: int) -> int:
    return ((x + m - 1) // m) * m


def _min_sublanes(dtype) -> int:
    # Native sublane packing: f32 -> 8, bf16/f16 -> 16, int8/fp8 -> 32.
    return max(8, 32 // max(1, jnp.dtype(dtype).itemsize))


def _regularize_kernel(reg_ref, loss_ref, out_ref):
    # reg_ref  : SMEM (1,) f32     precomputed 0.5 * l2reg * ||theta||^2
    # loss_ref : VMEM (T, LANES)   lane-dense tile of the flattened loss (native dtype)
    # out_ref  : VMEM (T, LANES)   regularized tile (same dtype as input)
    x = loss_ref[...].astype(jnp.float32)              # in-vreg upcast (free VPU work)
    out_ref[...] = (x + reg_ref[0]).astype(out_ref.dtype)


def regularize(loss: jax.Array, theta: jax.Array, l2reg=None, *,
               force_pallas: bool = False) -> jax.Array:
    """Pallas equivalent of Loss.regularize.

    loss  : any shape (per-sample losses, e.g. (N, 1)), floating dtype preferred
    theta : model parameters (any shape)
    l2reg : python float or None; None means no regularization
            (the class constructor maps l2reg <= 0 to None, as torch does).
    """
    if l2reg is None:
        return loss

    orig_shape = loss.shape
    n = int(loss.size)

    # Tiny O(D) reduction done once in the wrapper; 0.5*l2reg folded at trace
    # time (python float).  Keeps the streaming kernel purely memory bound.
    theta_f32 = theta.astype(jnp.float32)
    reg = (0.5 * float(l2reg)) * jnp.sum(theta_f32 * theta_f32)      # () f32

    is_float = jnp.issubdtype(loss.dtype, jnp.floating)

    # Fast path: small losses (the common skwdro case) -> one fused XLA
    # broadcast-add at roofline; also the fallback for non-float dtypes.
    # TODO(synk): torch would promote integer losses to float; we keep the
    #             original dtype here for API symmetry with the kernel path.
    if (not force_pallas and n <= SMALL_N_ELEMS) or not is_float:
        return (loss.astype(jnp.float32) + reg).astype(loss.dtype)

    # Lane-dense slab in the loss's NATIVE dtype (no wrapper astype copies).
    rows = pl.cdiv(n, LANES)
    sub = _min_sublanes(loss.dtype)
    if rows <= sub:
        tile_rows = rows                                 # single full-array block
    else:
        # >= 2 blocks so v7x can shard across both TensorCores; cap at ~2 MiB.
        tile_rows = min(TILE_ROWS, _round_up(pl.cdiv(rows, 2), sub))
    grid = (pl.cdiv(rows, tile_rows),)

    flat = jnp.ravel(loss)
    pad = rows * LANES - n                               # < LANES tail elements
    if pad:
        flat = jnp.pad(flat, (0, pad))
    slab = flat.reshape(rows, LANES)

    reg1 = jnp.reshape(reg, (1,))                        # (1,) f32 SMEM scalar

    out_slab = pl.pallas_call(
        _regularize_kernel,
        out_shape=jax.ShapeDtypeStruct((rows, LANES), loss.dtype),
        grid=grid,
        in_specs=[
            pl.BlockSpec(memory_space=pltpu.MemorySpace.SMEM),       # reg scalar
            pl.BlockSpec((tile_rows, LANES), lambda i: (i, 0)),      # loss tile
        ],
        out_specs=pl.BlockSpec((tile_rows, LANES), lambda i: (i, 0)),
        compiler_params=pltpu.CompilerParams(
            dimension_semantics=("parallel",),                       # v7x: 2 TCs
        ),
    )(reg1, slab)

    return out_slab.reshape(-1)[:n].reshape(orig_shape)


class PallasLoss:
    """Minimal JAX stand-in for skwdro Loss: holds theta and l2reg, exposes
    regularize() backed by the Pallas streaming kernel above."""

    def __init__(self, theta: jax.Array, l2reg=None):
        self._theta = jnp.reshape(theta, (1, -1)).astype(jnp.float32)
        # Matches torch __init__: None if l2reg is None or l2reg <= 0.
        self.l2reg = None if (l2reg is None or l2reg <= 0.0) else float(l2reg)

    @property
    def theta(self):
        return self._theta

    @property
    def intercept(self):
        # TODO(synk): abstract property in the torch base class; no parameter defined.
        return None

    def value(self, xi, xi_labels=None):
        # TODO(synk): abstract in the torch base class (NotImplementedError).
        raise NotImplementedError("Please Implement this method")

    def forward(self, *args):
        return self.value(*args)

    def regularize(self, loss: jax.Array, *, force_pallas: bool = False) -> jax.Array:
        return regularize(loss, self._theta, self.l2reg, force_pallas=force_pallas)


if __name__ == "__main__":
    key = jax.random.PRNGKey(0)
    k_theta, k1, k2, k3 = jax.random.split(key, 4)

    D = 32
    theta = jax.random.normal(k_theta, (1, D), dtype=jnp.float32)
    l2reg = 0.1
    reg_val = 0.5 * l2reg * jnp.sum(theta * theta)

    model = PallasLoss(theta, l2reg=l2reg)

    # 1) Common skwdro case: tiny (N, 1) loss -> fused jnp fast path.
    loss_a = jax.random.normal(k1, (8, 1), dtype=jnp.float32)
    out_a = jax.block_until_ready(model.regularize(loss_a))
    assert out_a.shape == loss_a.shape and out_a.dtype == loss_a.dtype
    assert jnp.allclose(out_a, loss_a + reg_val, rtol=1e-6, atol=1e-6)

    # 2) Same tiny loss forced through the Pallas kernel (single full block).
    out_b = jax.block_until_ready(model.regularize(loss_a, force_pallas=True))
    assert jnp.allclose(out_b, loss_a + reg_val, rtol=1e-6, atol=1e-6)

    # 3) Multi-block ragged grid (rows=10, tile_rows=8, grid=2) + tail padding.
    loss_c = jax.random.normal(k2, (5000, 1), dtype=jnp.float32)
    out_c = jax.block_until_ready(model.regularize(loss_c, force_pallas=True))
    assert out_c.shape == loss_c.shape and out_c.dtype == loss_c.dtype
    assert jnp.allclose(out_c, loss_c + reg_val, rtol=1e-6, atol=1e-6)

    # 4) bf16 loss streamed in native dtype, f32 add in-vreg, bf16 store.
    loss_d = jax.random.normal(k3, (300, 1), dtype=jnp.bfloat16)
    out_d = jax.block_until_ready(model.regularize(loss_d, force_pallas=True))
    assert out_d.shape == loss_d.shape and out_d.dtype == jnp.bfloat16
    ref_d = (loss_d.astype(jnp.float32) + reg_val).astype(jnp.bfloat16)
    assert jnp.allclose(out_d.astype(jnp.float32), ref_d.astype(jnp.float32),
                        rtol=2e-2, atol=2e-2)

    # 5) l2reg=None and l2reg<=0 -> identity (torch __init__ semantics).
    out_e = jax.block_until_ready(PallasLoss(theta, l2reg=None).regularize(loss_a))
    out_f = jax.block_until_ready(PallasLoss(theta, l2reg=-1.0).regularize(loss_a))
    assert jnp.allclose(out_e, loss_a) and jnp.allclose(out_f, loss_a)

    print("KERNEL_OK")
</pallas_src>

<mosaic_0001>
module attributes {stable_mosaic.version = 11 : i64} {
  func.func @_regularize_kernel(%arg0: i32, %arg1: memref<1xf32, #tpu.memory_space<smem>>, %arg2: memref<1x512xf32, #tpu.memory_space<vmem>>, %arg3: memref<1x512xf32, #tpu.memory_space<vmem>>) attributes {dimension_semantics = [#tpu.dimension_semantics<parallel>], iteration_bounds = array<i64: 1>, scalar_prefetch = 0 : i64, scratch_operands = 0 : i64, tpu.core_type = #tpu.core_type<tc>, window_params = [{transform_indices = @transform_0, window_bounds = array<i64: 1>}, {transform_indices = @transform_1, window_bounds = array<i64: 1, 512>}, {transform_indices = @transform_2, window_bounds = array<i64: 1, 512>}]} {
    %c0 = arith.constant 0 : index
    %c0_0 = arith.constant 0 : index
    %0 = vector.load %arg2[%c0, %c0_0] : memref<1x512xf32, #tpu.memory_space<vmem>>, vector<1x512xf32>
    %c0_1 = arith.constant 0 : index
    %1 = memref.load %arg1[%c0_1] : memref<1xf32, #tpu.memory_space<smem>>
    %2 = vector.broadcast %1 : f32 to vector<1x512xf32>
    %3 = arith.addf %0, %2 : vector<1x512xf32>
    %c0_2 = arith.constant 0 : index
    %c0_3 = arith.constant 0 : index
    %4 = vector.load %arg3[%c0_2, %c0_3] : memref<1x512xf32, #tpu.memory_space<vmem>>, vector<1x512xf32>
    tpu.vector_store %arg3[%c0_2, %c0_3], %3 {strides = array<i32>} : memref<1x512xf32, #tpu.memory_space<vmem>>, vector<1x512xf32>,
    return
  }
  func.func @transform_0(%arg0: i32) -> i32 {
    %c0_i32 = arith.constant 0 : i32
    %c0_i32_0 = arith.constant 0 : i32
    return %c0_i32 : i32
  }
  func.func @transform_1(%arg0: i32) -> (i32, i32) {
    %c0_i32 = arith.constant 0 : i32
    %c0_i32_0 = arith.constant 0 : i32
    return %arg0, %c0_i32 : i32, i32
  }
  func.func @transform_2(%arg0: i32) -> (i32, i32) {
    %c0_i32 = arith.constant 0 : i32
    %c0_i32_0 = arith.constant 0 : i32
    return %arg0, %c0_i32 : i32, i32
  }
}

</mosaic_0001>

<llo_original>
// kernel: tpu_custom_call.1
$region0: #{tpu_custom_call.1}
  #allocation0 [shape = 'u32[]', space=smem, size = 0x4, offset = 0x4, fixed_abs, tag = 'smem constant byte address 0x4 - core index']
  #allocation1 [shape = 'u32[72,128]{1,0:T(1,128)}', space=vmem, size = 0x9000, scoped, tag = 'internal scratch']
  #allocation2 [shape = 'f32[1]{0:T(128)S(6)}', space=smem, size = 0x200, scoped, tag = 'scoped memory for tpu_custom_call.1']
  %s0 = inlined_call_operand.<no memory space> [shape: f32[1], index: 0, kind: input, shape index: {}]
  %s1 = inlined_call_operand.hbm [shape: f32[1,512], index: 1, kind: input, shape index: {}]
  %s2 = inlined_call_operand.hbm [shape: f32[1,512], index: 2, kind: output, shape index: {}]
  %s3 = sld [smem:[#allocation0]]
  $region22: #{tpu_custom_call.1} parent=0
    _
  %s5 = ssub.s32 1, %s3
  %s6 = scalar_select 0, %s5, %s3
  %7 = sst [smem:[#allocation2]] %s0
  $region1: #{tpu_custom_call.1} parent=0
    #allocation3 [shape = 'u8[2048]{0}', space=vmem, size = 0x800, scoped, tag = 'input window, operand 1, single buffered']
    #allocation4 [shape = 's32[1]{0}', space=sflag, size = 0x4, scoped, tag = 'scoped memory for tpu_custom_call.1']
    #allocation5 [shape = 's32[1]{0}', space=sflag, size = 0x4, scoped, tag = 'scoped memory for tpu_custom_call.1']
    #allocation6 [shape = 'u8[2048]{0}', space=vmem, size = 0x800, scoped, tag = 'output window, operand 0, single buffered']
    %8 = vsyncpa [#allocation4], 0
    %9 = vsyncpa [#allocation5], 0
    // Predicated region
    $region2: #{tpu_custom_call.1} parent=1 // pred_check
      _
    $region3: #{tpu_custom_call.1} parent=1 // pred_check_branch
      %11 = sbr.rel (0) target = $region5
    $region4: #{tpu_custom_call.1} parent=1 // pred_region
      _
    $region5: #{tpu_custom_call.1} parent=1 // pred_fallthru
      _
    // Predicated region
    $region6: #{tpu_custom_call.1} parent=1 // pred_check
      _
    $region7: #{tpu_custom_call.1} parent=1 // pred_check_branch
      %13 = sbr.rel (0) target = $region9
    $region8: #{tpu_custom_call.1} parent=1 // pred_region
      %15 = vsyncadd [#allocation4], 0
      %s17 = sshll.u32 %s1, 4
      %s18 = int_to_ptr.hbm [resolvable:$true] %s17
      %s19 = sshll.u32 [#allocation3], 4
      %s20 = int_to_ptr.vmem [resolvable:$true] %s19
      %22 = dma.hbm_to_vmem [thread:$0]  %s18, 64, %s20, [#allocation4]
    $region9: #{tpu_custom_call.1} parent=1 // pred_fallthru
      _
    // Predicated region
    $region10: #{tpu_custom_call.1} parent=1 // pred_check
      _
    $region11: #{tpu_custom_call.1} parent=1 // pred_check_branch
      %24 = sbr.rel (0) target = $region13
    $region12: #{tpu_custom_call.1} parent=1 // pred_region
      %26 = dma.done [#allocation4], 64
    $region13: #{tpu_custom_call.1} parent=1 // pred_fallthru
      _
    %v27 = vld [vmem:[#allocation3] sm:$0xf]
    %s28 = sld [smem:[#allocation2]]
    %v29 = vstv %s28
    %v30 = vadd.f32 %v27, %v29
    %v31 = vlaneseq
    %vm32 = vcmp.ge.s32.totalorder %v31, 0
    %vm33 = vcmp.lt.s32.totalorder %v31, 512
    %vm34 = vmand %vm32, %vm33
    %35 = vst.msk [vmem:[#allocation6] sm:$0xf] %vm34, %v30
    // Predicated region
    $region14: #{tpu_custom_call.1} parent=1 // pred_check
      _
    $region15: #{tpu_custom_call.1} parent=1 // pred_check_branch
      %37 = sbr.rel (0) target = $region17
    $region16: #{tpu_custom_call.1} parent=1 // pred_region
      %39 = vsyncadd [#allocation5], 0
      %s41 = sshll.u32 [#allocation6], 4
      %s42 = int_to_ptr.vmem [resolvable:$true] %s41
      %s43 = sshll.u32 %s2, 4
      %s44 = int_to_ptr.hbm [resolvable:$true] %s43
      %46 = dma.vmem_to_hbm [thread:$0]  %s42, 64, %s44, [#allocation5]
    $region17: #{tpu_custom_call.1} parent=1 // pred_fallthru
      _
    // Predicated region
    $region18: #{tpu_custom_call.1} parent=1 // pred_check
      _
    $region19: #{tpu_custom_call.1} parent=1 // pred_check_branch
      %48 = sbr.rel (0) target = $region21
    $region20: #{tpu_custom_call.1} parent=1 // pred_region
      %50 = dma.done [#allocation5], 64
    $region21: #{tpu_custom_call.1} parent=1 // pred_fallthru
      _
    %51 = vsyncpa [#allocation4], 1
    %52 = vsyncpa [#allocation5], 1

</llo_original>
